<compile_context>
chip_gen: v7x
topology: tpu7x:2x2x1
jax: 0.10.0
libtpu: 0.0.40
codegen_flags: <defaults>
</compile_context>

<pallas_src>
import functools

import jax
import jax.numpy as jnp
from jax.experimental import pallas as pl
from jax.experimental.pallas import tpu as pltpu


def _gcn_layer_kernel(x_ref, adj_ref, w_ref, b_ref, o_ref, z_ref, *, eps, block_b, c):
    """One grid step = `block_b` graphs.

    x_ref:[Bt,N,C]  adj_ref:[Bt,N,N]  w_ref:[c_out,c_in]  b_ref:[c_out,1]
    o_ref:[Bt,N,C]  z_ref (VMEM scratch):[Bt,c_out,C]
    """
    w = w_ref[...]                                # resident for the whole step
    bias = b_ref[...].astype(jnp.float32)         # [c_out, 1]; broadcast hoisted out of the loop

    # ---- Batched projection: one wide MXU matmul for the whole block. ----
    # Transpose-free algebra:  PyTorch (x.T @ W.T + b).T == W @ x + b[:, None].
    # Lane-axis concat of full [N, C] tiles (no transpose involved).
    x_all = jnp.concatenate([x_ref[bb] for bb in range(block_b)], axis=1)   # [N, block_b*C]
    z_all = jnp.dot(w, x_all, preferred_element_type=jnp.float32) + bias    # [c_out, block_b*C] f32
    for j in range(block_b):                      # static lane slices -> static scratch stores
        z_ref[j] = z_all[:, j * c:(j + 1) * c].astype(z_ref.dtype)

    # ---- Per-graph aggregation (adj differs per graph); fori_loop bounds live ranges. ----
    def body(bb, carry):
        adj = adj_ref[bb]                                                    # [N, N]
        # Degree reduced directly into f32 (no full-precision copy of adj).
        deg = jnp.sum(adj, axis=-1, dtype=jnp.float32, keepdims=True) + eps  # [N, 1]
        inv_deg = pl.reciprocal(deg, approx=False)
        agg = jnp.dot(adj, z_ref[bb], preferred_element_type=jnp.float32)    # [N, C] f32
        o_ref[bb] = (agg * inv_deg).astype(o_ref.dtype)
        return carry

    jax.lax.fori_loop(0, block_b, body, None, unroll=min(block_b, 2))


def gcn_layer(node_feats, adj_matrix, weight, bias, *, eps=1e-4, block_b=None):
    """Pallas GCNLayer.forward.

    node_feats:[B,N,C]  adj_matrix:[B,N,N]  weight:[c_out,c_in]  bias:[c_out]
    adj_matrix may be passed in a narrower float dtype than node_feats (e.g. bfloat16:
    0/1 adjacency is exact) to halve its HBM stream; the aggregation matmul then runs in
    that dtype with f32 accumulation.
    """
    B, N, C = node_feats.shape
    c_out, c_in = weight.shape
    # The PyTorch module only type-checks when the node/feature dims are square.
    assert C == c_in and N == c_in and c_out == N, (
        f"GCNLayer requires num_nodes == c_in == c_out "
        f"(got N={N}, C={C}, c_in={c_in}, c_out={c_out})")
    assert jnp.issubdtype(node_feats.dtype, jnp.floating), "node_feats must be floating"
    assert jnp.issubdtype(adj_matrix.dtype, jnp.floating), "adjacency must be a float dtype"
    # TODO(synk): int8 (v5e/v6e) / fp8 (v7x) adjacency streaming needs a mixed-dtype MXU
    # path; bfloat16 adjacency is the supported narrow option here.

    x_dtype = node_feats.dtype
    agg_dtype = adj_matrix.dtype            # aggregation-matmul operand dtype (z cast to it)
    weight = weight.astype(x_dtype)         # projection operands share x's dtype
    b_col = bias.astype(jnp.float32).reshape(c_out, 1)

    x_sz = jnp.dtype(x_dtype).itemsize
    adj_sz = jnp.dtype(agg_dtype).itemsize
    per_graph_hbm = N * N * adj_sz + 2 * N * C * x_sz        # adj + x + out per graph

    # ---- Generation-aware VMEM budget (v7x: 64 MiB physical, v5e/v6e: 128 MiB). ----
    try:
        vmem_cap = int(pltpu.get_tpu_info().vmem_capacity_bytes)
    except Exception:
        vmem_cap = 64 << 20                                   # conservative fallback
    vmem_budget = min(int(0.75 * vmem_cap), 100 << 20)        # ~48 MiB v7x, ~96 MiB v5e/v6e

    def vmem_need(bb):
        io_block = bb * per_graph_hbm                                   # x + adj + out, one step
        z_scratch = bb * c_out * C * adj_sz
        interm = bb * C * (N * x_sz + c_out * 4)                        # x_all concat + f32 z_all
        w_bytes = c_out * c_in * x_sz + c_out * 128 * 4                 # weight + padded bias col
        return 2 * io_block + z_scratch + interm + 2 * w_bytes + (2 << 20)

    # ---- Roofline-derived block_b: ~4 MiB of HBM I/O per step, grid extent >= 4 when B
    # allows (>= 2 pipelined steps per v7x TensorCore), shrunk to fit the VMEM budget. ----
    if block_b is None:
        target_io = 4 << 20
        bb = max(1, min(B, -(-target_io // per_graph_hbm)))
        bb = min(bb, max(1, B // 4))
        while bb > 1 and vmem_need(bb) > vmem_budget:
            bb -= 1
        block_b = bb
    block_b = max(1, min(int(block_b), B))

    # ---- Awkward batch sizes: best divisor near the target, else pad and slice. ----
    divisor = 1
    for d in range(block_b, 0, -1):
        if B % d == 0:
            divisor = d
            break
    if 2 * divisor >= block_b:
        block_b, pad = divisor, 0
    else:
        pad = (-B) % block_b
    if pad:
        node_feats = jnp.pad(node_feats, ((0, pad), (0, 0), (0, 0)))
        adj_matrix = jnp.pad(adj_matrix, ((0, pad), (0, 0), (0, 0)))
    b_padded = B + pad
    grid = (b_padded // block_b,)

    vmem_limit = int(min(max(vmem_need(block_b) + (4 << 20), 32 << 20), vmem_budget))

    flops = int(2 * b_padded * N * C * (c_in + N))            # projection + aggregation
    bytes_accessed = int(b_padded * (N * N * adj_sz + 2 * N * C * x_sz)
                         + c_out * c_in * x_sz + c_out * 4)

    kernel = functools.partial(_gcn_layer_kernel, eps=eps, block_b=block_b, c=C)

    out = pl.pallas_call(
        kernel,
        out_shape=jax.ShapeDtypeStruct((b_padded, N, C), x_dtype),
        grid_spec=pltpu.PrefetchScalarGridSpec(
            num_scalar_prefetch=0,
            grid=grid,
            in_specs=[
                pl.BlockSpec((block_b, N, C), lambda i: (i, 0, 0)),    # node features
                pl.BlockSpec((block_b, N, N), lambda i: (i, 0, 0)),    # adjacency
                pl.BlockSpec((c_out, c_in), lambda i: (0, 0)),         # weight (constant block)
                pl.BlockSpec((c_out, 1), lambda i: (0, 0)),            # bias column (constant)
            ],
            out_specs=pl.BlockSpec((block_b, N, C), lambda i: (i, 0, 0)),
            scratch_shapes=[pltpu.VMEM((block_b, c_out, C), agg_dtype)],
        ),
        compiler_params=pltpu.CompilerParams(
            dimension_semantics=("parallel",),
            vmem_limit_bytes=vmem_limit,
        ),
        cost_estimate=pl.CostEstimate(
            flops=flops, transcendentals=0, bytes_accessed=bytes_accessed),
    )(node_feats, adj_matrix, weight, b_col)

    return out[:B] if pad else out


def _reference(node_feats, adj, w, b, eps=1e-4):
    """Pure-JAX replica of the PyTorch forward (transposes kept, for validation)."""
    deg = jnp.sum(adj, axis=-1, keepdims=True)
    y = jnp.einsum("bcn,on->bco", jnp.swapaxes(node_feats, 1, 2), w,
                   precision=jax.lax.Precision.HIGHEST) + b
    z = jnp.swapaxes(y, 1, 2)
    out = jnp.einsum("bij,bjc->bic", adj, z, precision=jax.lax.Precision.HIGHEST)
    return out / (deg + eps)


if __name__ == "__main__":
    # Small, lane-dense shapes consistent with the module's constraint N == c_in == c_out.
    B, N = 8, 128
    c_in = c_out = N

    key = jax.random.PRNGKey(0)
    k_x, k_adj, k_w, k_b = jax.random.split(key, 4)

    node_feats = jax.random.normal(k_x, (B, N, c_in), dtype=jnp.float32)
    adj = (jax.random.uniform(k_adj, (B, N, N)) > 0.7).astype(jnp.float32)
    eye = jnp.broadcast_to(jnp.eye(N, dtype=jnp.float32), (B, N, N))
    adj = jnp.clip(adj + eye, 0.0, 1.0)   # identity connections already added

    # nn.Linear default init (uniform +-1/sqrt(fan_in)), deterministic.
    bound = 1.0 / jnp.sqrt(jnp.float32(c_in))
    w = jax.random.uniform(k_w, (c_out, c_in), jnp.float32, -bound, bound)
    b = jax.random.uniform(k_b, (c_out,), jnp.float32, -bound, bound)

    ref = jax.block_until_ready(_reference(node_feats, adj, w, b))

    # 1) f32 path: tight agreement with the reference.
    out = jax.block_until_ready(gcn_layer(node_feats, adj, w, b))
    assert out.shape == (B, N, c_in)
    assert jnp.allclose(out, ref, atol=1e-4, rtol=1e-4), "f32 kernel mismatch vs reference"

    # 2) bf16 MXU path (f32 accumulation): halves all HBM streams, looser tolerance.
    out_bf16 = jax.block_until_ready(
        gcn_layer(node_feats.astype(jnp.bfloat16), adj.astype(jnp.bfloat16),
                  w.astype(jnp.bfloat16), b.astype(jnp.bfloat16)))
    assert out_bf16.shape == (B, N, c_in)
    assert jnp.allclose(out_bf16.astype(jnp.float32), ref, atol=2e-2, rtol=2e-2), \
        "bf16 kernel mismatch vs reference"

    # 3) Mixed path: f32 features, bf16 adjacency (narrow the dominant HBM stream only).
    out_mixed = jax.block_until_ready(gcn_layer(node_feats, adj.astype(jnp.bfloat16), w, b))
    assert out_mixed.shape == (B, N, c_in)
    assert jnp.allclose(out_mixed, ref, atol=2e-2, rtol=2e-2), \
        "mixed-dtype kernel mismatch vs reference"

    # 4) Awkward batch size: B=7 with block_b=3 exercises the pad-and-slice path.
    out7 = jax.block_until_ready(gcn_layer(node_feats[:7], adj[:7], w, b, block_b=3))
    ref7 = jax.block_until_ready(_reference(node_feats[:7], adj[:7], w, b))
    assert out7.shape == (7, N, c_in)
    assert jnp.allclose(out7, ref7, atol=1e-4, rtol=1e-4), "padded-batch kernel mismatch"

    print("KERNEL_OK")
</pallas_src>

<mosaic_0001>
module attributes {stable_mosaic.version = 11 : i64} {
  func.func @_gcn_layer_kernel(%arg0: i32, %arg1: memref<2x128x128xf32, #tpu.memory_space<vmem>>, %arg2: memref<2x128x128xf32, #tpu.memory_space<vmem>>, %arg3: memref<128x128xf32, #tpu.memory_space<vmem>>, %arg4: memref<128x1xf32, #tpu.memory_space<vmem>>, %arg5: memref<2x128x128xf32, #tpu.memory_space<vmem>>, %arg6: memref<2x128x128xf32, #tpu.memory_space<vmem>>) attributes {dimension_semantics = [#tpu.dimension_semantics<parallel>], iteration_bounds = array<i64: 4>, scalar_prefetch = 0 : i64, scratch_operands = 1 : i64, tpu.core_type = #tpu.core_type<tc>, window_params = [{transform_indices = @transform_0, window_bounds = array<i64: 2, 128, 128>}, {transform_indices = @transform_1, window_bounds = array<i64: 2, 128, 128>}, {pipeline_mode = #tpu.pipeline_mode<synchronous>, transform_indices = @transform_2, window_bounds = array<i64: 128, 128>}, {pipeline_mode = #tpu.pipeline_mode<synchronous>, transform_indices = @transform_3, window_bounds = array<i64: 128, 1>}, {transform_indices = @transform_4, window_bounds = array<i64: 2, 128, 128>}]} {
    %c0 = arith.constant 0 : index
    %c0_0 = arith.constant 0 : index
    %0 = vector.load %arg3[%c0, %c0_0] : memref<128x128xf32, #tpu.memory_space<vmem>>, vector<128x128xf32>
    %c0_1 = arith.constant 0 : index
    %c0_2 = arith.constant 0 : index
    %1 = vector.load %arg4[%c0_1, %c0_2] : memref<128x1xf32, #tpu.memory_space<vmem>>, vector<128x1xf32>
    %c0_3 = arith.constant 0 : index
    %c0_4 = arith.constant 0 : index
    %c0_5 = arith.constant 0 : index
    %2 = vector.load %arg1[%c0_3, %c0_4, %c0_5] : memref<2x128x128xf32, #tpu.memory_space<vmem>>, vector<1x128x128xf32>
    %3 = vector.shape_cast %2 : vector<1x128x128xf32> to vector<128x128xf32>
    %c1 = arith.constant 1 : index
    %c0_6 = arith.constant 0 : index
    %c0_7 = arith.constant 0 : index
    %4 = vector.load %arg1[%c1, %c0_6, %c0_7] : memref<2x128x128xf32, #tpu.memory_space<vmem>>, vector<1x128x128xf32>
    %5 = vector.shape_cast %4 : vector<1x128x128xf32> to vector<128x128xf32>
    %6 = tpu.concatenate %3, %5 in 1 : vector<128x128xf32>, vector<128x128xf32> -> vector<128x256xf32>
    %cst = arith.constant dense<0.000000e+00> : vector<128x256xf32>
    %7 = tpu.matmul %0, %6, %cst {dimension_numbers = #tpu.dot_dimension_numbers<[1], [0], [0], [1], [0, 0, 1, 1], [], []>} : vector<128x128xf32>, vector<128x256xf32>, vector<128x256xf32> -> vector<128x256xf32>
    %8 = vector.broadcast %1 : vector<128x1xf32> to vector<128x256xf32>
    %9 = arith.addf %7, %8 : vector<128x256xf32>
    %10 = vector.extract_strided_slice %9 {offsets = [0, 0], sizes = [128, 128], strides = [1, 1]} : vector<128x256xf32> to vector<128x128xf32>
    %c0_8 = arith.constant 0 : index
    %c0_9 = arith.constant 0 : index
    %c0_10 = arith.constant 0 : index
    %11 = vector.load %arg6[%c0_8, %c0_9, %c0_10] : memref<2x128x128xf32, #tpu.memory_space<vmem>>, vector<1x128x128xf32>
    %12 = vector.shape_cast %11 : vector<1x128x128xf32> to vector<128x128xf32>
    %13 = vector.shape_cast %10 : vector<128x128xf32> to vector<1x128x128xf32>
    tpu.vector_store %arg6[%c0_8, %c0_9, %c0_10], %13 {strides = array<i32>} : memref<2x128x128xf32, #tpu.memory_space<vmem>>, vector<1x128x128xf32>,
    %14 = vector.extract_strided_slice %9 {offsets = [0, 128], sizes = [128, 128], strides = [1, 1]} : vector<128x256xf32> to vector<128x128xf32>
    %c1_11 = arith.constant 1 : index
    %c0_12 = arith.constant 0 : index
    %c0_13 = arith.constant 0 : index
    %15 = vector.load %arg6[%c1_11, %c0_12, %c0_13] : memref<2x128x128xf32, #tpu.memory_space<vmem>>, vector<1x128x128xf32>
    %16 = vector.shape_cast %15 : vector<1x128x128xf32> to vector<128x128xf32>
    %17 = vector.shape_cast %14 : vector<128x128xf32> to vector<1x128x128xf32>
    tpu.vector_store %arg6[%c1_11, %c0_12, %c0_13], %17 {strides = array<i32>} : memref<2x128x128xf32, #tpu.memory_space<vmem>>, vector<1x128x128xf32>,
    %c0_i32 = arith.constant 0 : i32
    %18 = arith.index_cast %c0_i32 : i32 to index
    %c0_14 = arith.constant 0 : index
    %c0_15 = arith.constant 0 : index
    %19 = vector.load %arg2[%18, %c0_14, %c0_15] : memref<2x128x128xf32, #tpu.memory_space<vmem>>, vector<1x128x128xf32>
    %20 = vector.shape_cast %19 : vector<1x128x128xf32> to vector<128x128xf32>
    %cst_16 = arith.constant dense<0.000000e+00> : vector<128xf32>
    %21 = vector.multi_reduction <add>, %20, %cst_16 [1] : vector<128x128xf32> to vector<128xf32>
    %22 = vector.shape_cast %21 : vector<128xf32> to vector<128x1xf32>
    %cst_17 = arith.constant 9.99999974E-5 : f32
    %23 = vector.broadcast %cst_17 : f32 to vector<128x1xf32>
    %24 = arith.addf %22, %23 : vector<128x1xf32>
    %25 = tpu.reciprocal %24 : vector<128x1xf32> -> vector<128x1xf32>
    %26 = arith.index_cast %c0_i32 : i32 to index
    %c0_18 = arith.constant 0 : index
    %c0_19 = arith.constant 0 : index
    %27 = vector.load %arg6[%26, %c0_18, %c0_19] : memref<2x128x128xf32, #tpu.memory_space<vmem>>, vector<1x128x128xf32>
    %28 = vector.shape_cast %27 : vector<1x128x128xf32> to vector<128x128xf32>
    %cst_20 = arith.constant dense<0.000000e+00> : vector<128x128xf32>
    %29 = tpu.matmul %20, %28, %cst_20 {dimension_numbers = #tpu.dot_dimension_numbers<[1], [0], [0], [1], [0, 0, 1, 1], [], []>} : vector<128x128xf32>, vector<128x128xf32>, vector<128x128xf32> -> vector<128x128xf32>
    %30 = vector.broadcast %25 : vector<128x1xf32> to vector<128x128xf32>
    %31 = arith.mulf %29, %30 : vector<128x128xf32>
    %32 = arith.index_cast %c0_i32 : i32 to index
    %c0_21 = arith.constant 0 : index
    %c0_22 = arith.constant 0 : index
    %33 = vector.load %arg5[%32, %c0_21, %c0_22] : memref<2x128x128xf32, #tpu.memory_space<vmem>>, vector<1x128x128xf32>
    %34 = vector.shape_cast %33 : vector<1x128x128xf32> to vector<128x128xf32>
    %35 = vector.shape_cast %31 : vector<128x128xf32> to vector<1x128x128xf32>
    tpu.vector_store %arg5[%32, %c0_21, %c0_22], %35 {strides = array<i32>} : memref<2x128x128xf32, #tpu.memory_space<vmem>>, vector<1x128x128xf32>,
    %c1_i32 = arith.constant 1 : i32
    %36 = arith.index_cast %c1_i32 : i32 to index
    %c0_23 = arith.constant 0 : index
    %c0_24 = arith.constant 0 : index
    %37 = vector.load %arg2[%36, %c0_23, %c0_24] : memref<2x128x128xf32, #tpu.memory_space<vmem>>, vector<1x128x128xf32>
    %38 = vector.shape_cast %37 : vector<1x128x128xf32> to vector<128x128xf32>
    %cst_25 = arith.constant dense<0.000000e+00> : vector<128xf32>
    %39 = vector.multi_reduction <add>, %38, %cst_25 [1] : vector<128x128xf32> to vector<128xf32>
    %40 = vector.shape_cast %39 : vector<128xf32> to vector<128x1xf32>
    %cst_26 = arith.constant 9.99999974E-5 : f32
    %41 = vector.broadcast %cst_26 : f32 to vector<128x1xf32>
    %42 = arith.addf %40, %41 : vector<128x1xf32>
    %43 = tpu.reciprocal %42 : vector<128x1xf32> -> vector<128x1xf32>
    %44 = arith.index_cast %c1_i32 : i32 to index
    %c0_27 = arith.constant 0 : index
    %c0_28 = arith.constant 0 : index
    %45 = vector.load %arg6[%44, %c0_27, %c0_28] : memref<2x128x128xf32, #tpu.memory_space<vmem>>, vector<1x128x128xf32>
    %46 = vector.shape_cast %45 : vector<1x128x128xf32> to vector<128x128xf32>
    %cst_29 = arith.constant dense<0.000000e+00> : vector<128x128xf32>
    %47 = tpu.matmul %38, %46, %cst_29 {dimension_numbers = #tpu.dot_dimension_numbers<[1], [0], [0], [1], [0, 0, 1, 1], [], []>} : vector<128x128xf32>, vector<128x128xf32>, vector<128x128xf32> -> vector<128x128xf32>
    %48 = vector.broadcast %43 : vector<128x1xf32> to vector<128x128xf32>
    %49 = arith.mulf %47, %48 : vector<128x128xf32>
    %50 = arith.index_cast %c1_i32 : i32 to index
    %c0_30 = arith.constant 0 : index
    %c0_31 = arith.constant 0 : index
    %51 = vector.load %arg5[%50, %c0_30, %c0_31] : memref<2x128x128xf32, #tpu.memory_space<vmem>>, vector<1x128x128xf32>
    %52 = vector.shape_cast %51 : vector<1x128x128xf32> to vector<128x128xf32>
    %53 = vector.shape_cast %49 : vector<128x128xf32> to vector<1x128x128xf32>
    tpu.vector_store %arg5[%50, %c0_30, %c0_31], %53 {strides = array<i32>} : memref<2x128x128xf32, #tpu.memory_space<vmem>>, vector<1x128x128xf32>,
    %c2_i32 = arith.constant 2 : i32
    return
  }
  func.func @transform_0(%arg0: i32) -> (i32, i32, i32) {
    %c0_i32 = arith.constant 0 : i32
    %c0_i32_0 = arith.constant 0 : i32
    %c0_i32_1 = arith.constant 0 : i32
    return %arg0, %c0_i32, %c0_i32_0 : i32, i32, i32
  }
  func.func @transform_1(%arg0: i32) -> (i32, i32, i32) {
    %c0_i32 = arith.constant 0 : i32
    %c0_i32_0 = arith.constant 0 : i32
    %c0_i32_1 = arith.constant 0 : i32
    return %arg0, %c0_i32, %c0_i32_0 : i32, i32, i32
  }
  func.func @transform_2(%arg0: i32) -> (i32, i32) {
    %c0_i32 = arith.constant 0 : i32
    %c0_i32_0 = arith.constant 0 : i32
    %c0_i32_1 = arith.constant 0 : i32
    return %c0_i32, %c0_i32_0 : i32, i32
  }
  func.func @transform_3(%arg0: i32) -> (i32, i32) {
    %c0_i32 = arith.constant 0 : i32
    %c0_i32_0 = arith.constant 0 : i32
    %c0_i32_1 = arith.constant 0 : i32
    return %c0_i32, %c0_i32_0 : i32, i32
  }
  func.func @transform_4(%arg0: i32) -> (i32, i32, i32) {
    %c0_i32 = arith.constant 0 : i32
    %c0_i32_0 = arith.constant 0 : i32
    %c0_i32_1 = arith.constant 0 : i32
    return %arg0, %c0_i32, %c0_i32_0 : i32, i32, i32
  }
}

</mosaic_0001>

<llo_original>
// kernel: tpu_custom_call.1
$region0: #{tpu_custom_call.1}
  #allocation0 [shape = 'u32[]', space=smem, size = 0x4, offset = 0x4, fixed_abs, tag = 'smem constant byte address 0x4 - core index']
  #allocation1 [shape = 'u32[144,128]{1,0:T(1,128)}', space=vmem, size = 0x12000, scoped, tag = 'internal scratch']
  #allocation2 [shape = 'f32[2,128,128]{2,1,0:T(8,128)}', space=vmem, size = 0x20000, scoped, tag = 'scratch operand']
  %s0 = inlined_call_operand.hbm [shape: f32[8,128,128], index: 0, kind: input, shape index: {}]
  %s1 = inlined_call_operand.hbm [shape: f32[8,128,128], index: 1, kind: input, shape index: {}]
  %s2 = inlined_call_operand.vmem [shape: f32[128,128], index: 2, kind: input, shape index: {}]
  %s3 = inlined_call_operand.vmem [shape: f32[128,1], index: 3, kind: input, shape index: {}]
  %s4 = inlined_call_operand.hbm [shape: f32[8,128,128], index: 4, kind: output, shape index: {}]
  %s5 = sld [smem:[#allocation0]]
  $region57: #{tpu_custom_call.1} parent=0
    _
  %s7 = ssub.s32 1, %s5
  %s8 = scalar_select 0, %s7, %s5
  $region1: #{tpu_custom_call.1} parent=0
    #allocation3 [shape = 'u8[262144]{0}', space=vmem, size = 0x40000, scoped, tag = 'input window, operand 0']
    #allocation4 [shape = 's32[2]{0}', space=sflag, size = 0x8, scoped, tag = 'scoped memory for tpu_custom_call.1']
    #allocation5 [shape = 's32[2]{0}', space=sflag, size = 0x8, scoped, tag = 'scoped memory for tpu_custom_call.1']
    #allocation6 [shape = 'u8[262144]{0}', space=vmem, size = 0x40000, scoped, tag = 'input window, operand 1']
    #allocation7 [shape = 's32[2]{0}', space=sflag, size = 0x8, scoped, tag = 'scoped memory for tpu_custom_call.1']
    #allocation8 [shape = 'u8[262144]{0}', space=vmem, size = 0x40000, scoped, tag = 'output window, operand 0']
    %9 = vsyncpa [#allocation4], 0
    %s10 = scalar_lea.sflag [#allocation4], 1
    %11 = vsyncpa %s10, 0
    %12 = vsyncpa [#allocation7], 0
    %s13 = scalar_lea.sflag [#allocation7], 1
    %14 = vsyncpa %s13, 0
    %15 = vsyncpa [#allocation5], 0
    %s16 = scalar_lea.sflag [#allocation5], 1
    %17 = vsyncpa %s16, 0
    loop: start=0, step=1, limit=6
    $region2: #{tpu_custom_call.1} parent=1 // loop_pre_header
      _
    $region3: #{tpu_custom_call.1} parent=1 // loop_header
      %s19 = sphi 0, %s23
      %p20 = scmp.ge.s32.totalorder %s19, 6
      %s29 = sphi 0, %s31
      %s32 = sphi 0, %s29
      %s33 = sphi 0, %s32
      %s49 = sphi 0, %s33
      %s55 = sphi 0, %s57
      %s58 = sphi 0, %s55
      %s59 = sphi 0, %s58
      %s75 = sphi 0, %s59
      %s79 = sphi 0, %s79
      %s81 = sphi 0, %s79
      %s82 = sphi 0, %s81
      %s96 = sphi 0, %s82
      %s100 = sphi 0, %s100
      %s102 = sphi 0, %s100
      %s103 = sphi 0, %s102
      %s117 = sphi 0, %s103
      %s123 = sphi 0, %s125
      %s126 = sphi 0, %s123
      %s127 = sphi 0, %s126
      %s143 = sphi 0, %s127
    $region4: #{tpu_custom_call.1} parent=1 // loop_header_branch
      %22 = sbr.rel (%p20) target = $region8
    $region5: #{tpu_custom_call.1} parent=1 // loop_body
      %s24 = ssub.s32 %s19, 1
      %s25 = ssub.s32 %s19, 2
      %s26 = sadd.s32 %s19, 1
      %s27 = ssub.s32 %s19, %s26
      %p28 = scmp.eq.s32.totalorder %s27, 0
      %s30 = sadd.s32 %s29, 1
      %s31 = scalar_select %p28, %s29, %s30
      %p34 = pneg %p28
      %p35 = scmp.eq.s32.totalorder %s19, 3
      %p36 = por %p34, %p35
      %p37 = scmp.ne.s32.totalorder %s29, %s32
      %p38 = scmp.eq.s32.totalorder %s19, 0
      %p39 = por %p37, %p38
      %p40 = scmp.ne.s32.totalorder %s29, %s32
      %p41 = scmp.eq.s32.totalorder %s24, 3
      %p42 = por %p40, %p41
      %p43 = scmp.ne.s32.totalorder %s32, %s33
      %p44 = scmp.eq.s32.totalorder %s24, 0
      %p45 = por %p43, %p44
      %p46 = scmp.ne.s32.totalorder %s32, %s33
      %p47 = scmp.eq.s32.totalorder %s25, 3
      %p48 = por %p46, %p47
      %p50 = scmp.ne.s32.totalorder %s33, %s49
      %p51 = scmp.eq.s32.totalorder %s25, 0
      %p52 = por %p50, %p51
      %s53 = ssub.s32 %s19, %s26
      %p54 = scmp.eq.s32.totalorder %s53, 0
      %s56 = sadd.s32 %s55, 1
      %s57 = scalar_select %p54, %s55, %s56
      %p60 = pneg %p54
      %p61 = scmp.eq.s32.totalorder %s19, 3
      %p62 = por %p60, %p61
      %p63 = scmp.ne.s32.totalorder %s55, %s58
      %p64 = scmp.eq.s32.totalorder %s19, 0
      %p65 = por %p63, %p64
      %p66 = scmp.ne.s32.totalorder %s55, %s58
      %p67 = scmp.eq.s32.totalorder %s24, 3
      %p68 = por %p66, %p67
      %p69 = scmp.ne.s32.totalorder %s58, %s59
      %p70 = scmp.eq.s32.totalorder %s24, 0
      %p71 = por %p69, %p70
      %p72 = scmp.ne.s32.totalorder %s58, %s59
      %p73 = scmp.eq.s32.totalorder %s25, 3
      %p74 = por %p72, %p73
      %p76 = scmp.ne.s32.totalorder %s59, %s75
      %p77 = scmp.eq.s32.totalorder %s25, 0
      %p78 = por %p76, %p77
      %s80 = sadd.s32 %s79, 1
      %p83 = scmp.eq.s32.totalorder %s19, 3
      %p84 = scmp.ne.s32.totalorder %s79, %s81
      %p85 = scmp.eq.s32.totalorder %s19, 0
      %p86 = por %p84, %p85
      %p87 = scmp.ne.s32.totalorder %s79, %s81
      %p88 = scmp.eq.s32.totalorder %s24, 3
      %p89 = por %p87, %p88
      %p90 = scmp.ne.s32.totalorder %s81, %s82
      %p91 = scmp.eq.s32.totalorder %s24, 0
      %p92 = por %p90, %p91
      %p93 = scmp.ne.s32.totalorder %s81, %s82
      %p94 = scmp.eq.s32.totalorder %s25, 3
      %p95 = por %p93, %p94
      %p97 = scmp.ne.s32.totalorder %s82, %s96
      %p98 = scmp.eq.s32.totalorder %s25, 0
      %p99 = por %p97, %p98
      %s101 = sadd.s32 %s100, 1
      %p104 = scmp.eq.s32.totalorder %s19, 3
      %p105 = scmp.ne.s32.totalorder %s100, %s102
      %p106 = scmp.eq.s32.totalorder %s19, 0
      %p107 = por %p105, %p106
      %p108 = scmp.ne.s32.totalorder %s100, %s102
      %p109 = scmp.eq.s32.totalorder %s24, 3
      %p110 = por %p108, %p109
      %p111 = scmp.ne.s32.totalorder %s102, %s103
      %p112 = scmp.eq.s32.totalorder %s24, 0
      %p113 = por %p111, %p112
      %p114 = scmp.ne.s32.totalorder %s102, %s103
      %p115 = scmp.eq.s32.totalorder %s25, 3
      %p116 = por %p114, %p115
      %p118 = scmp.ne.s32.totalorder %s103, %s117
      %p119 = scmp.eq.s32.totalorder %s25, 0
      %p120 = por %p118, %p119
      %s121 = ssub.s32 %s19, %s26
      %p122 = scmp.eq.s32.totalorder %s121, 0
      %s124 = sadd.s32 %s123, 1
      %s125 = scalar_select %p122, %s123, %s124
      %p128 = pneg %p122
      %p129 = scmp.eq.s32.totalorder %s19, 3
      %p130 = por %p128, %p129
      %p131 = scmp.ne.s32.totalorder %s123, %s126
      %p132 = scmp.eq.s32.totalorder %s19, 0
      %p133 = por %p131, %p132
      %p134 = scmp.ne.s32.totalorder %s123, %s126
      %p135 = scmp.eq.s32.totalorder %s24, 3
      %p136 = por %p134, %p135
      %p137 = scmp.ne.s32.totalorder %s126, %s127
      %p138 = scmp.eq.s32.totalorder %s24, 0
      %p139 = por %p137, %p138
      %p140 = scmp.ne.s32.totalorder %s126, %s127
      %p141 = scmp.eq.s32.totalorder %s25, 3
      %p142 = por %p140, %p141
      %p144 = scmp.ne.s32.totalorder %s127, %s143
      %p145 = scmp.eq.s32.totalorder %s25, 0
      %p146 = por %p144, %p145
      %p147 = scmp.le.s32.totalorder 1, %s19
      %p148 = scmp.lt.s32.totalorder %s19, 5
      %p149 = pnand %p147, %p148
      %p150 = pneg %p149
      // Predicated region
      $region9: #{tpu_custom_call.1} parent=5 // pred_check
        _
      $region10: #{tpu_custom_call.1} parent=5 // pred_check_branch
        %152 = sbr.rel (%p149) target = $region12
      $region11: #{tpu_custom_call.1} parent=5 // pred_region
        %s153 = ssub.s32 %s19, 1
        // Predicated region
        $region13: #{tpu_custom_call.1} parent=11 // pred_check
          %p154 = pneg %p92
        $region14: #{tpu_custom_call.1} parent=11 // pred_check_branch
          %156 = sbr.rel (%p154) target = $region16
        $region15: #{tpu_custom_call.1} parent=11 // pred_region
          _
        $region16: #{tpu_custom_call.1} parent=11 // pred_fallthru
          _
        // Predicated region
        $region17: #{tpu_custom_call.1} parent=11 // pred_check
          %p157 = pneg %p113
        $region18: #{tpu_custom_call.1} parent=11 // pred_check_branch
          %159 = sbr.rel (%p157) target = $region20
        $region19: #{tpu_custom_call.1} parent=11 // pred_region
          _
        $region20: #{tpu_custom_call.1} parent=11 // pred_fallthru
          _
      $region12: #{tpu_custom_call.1} parent=5 // pred_fallthru
        _
      %p160 = scmp.lt.s32.totalorder %s19, 4
      // Predicated region
      $region21: #{tpu_custom_call.1} parent=5 // pred_check
        %p161 = pneg %p160
      $region22: #{tpu_custom_call.1} parent=5 // pred_check_branch
        %163 = sbr.rel (%p161) target = $region24
      $region23: #{tpu_custom_call.1} parent=5 // pred_region
        // Predicated region
        $region25: #{tpu_custom_call.1} parent=23 // pred_check
          %p164 = pneg %p39
        $region26: #{tpu_custom_call.1} parent=23 // pred_check_branch
          %166 = sbr.rel (%p164) target = $region28
        $region27: #{tpu_custom_call.1} parent=23 // pred_region
          %s167 = sand.u32 %s29, 1
          %s168 = scalar_lea.sflag [#allocation4], %s167
          %s169 = sand.u32 %s29, 1
          %s170 = smul.addr %s169, 256
          %s171 = scalar_lea.vmem [#allocation3], %s170
          %s172 = smul.u32 2, %s19
          %s174 = ssub.s32 4096, 4096
          %175 = vsyncadd %s168, %s174
          %s176 = smul.addr %s172, 16
          %s177 = smul.addr %s176, 128
          %s178 = scalar_lea.hbm %s0, %s177
          %s179 = sshll.u32 %s171, 4
          %s180 = int_to_ptr.vmem [resolvable:$true] %s179
          %185 = dma.hbm_to_vmem [thread:$0]  %s178, 4096, %s180, %s168, 128, 128, 8
        $region28: #{tpu_custom_call.1} parent=23 // pred_fallthru
          _
        // Predicated region
        $region29: #{tpu_custom_call.1} parent=23 // pred_check
          %p186 = pneg %p65
        $region30: #{tpu_custom_call.1} parent=23 // pred_check_branch
          %188 = sbr.rel (%p186) target = $region32
        $region31: #{tpu_custom_call.1} parent=23 // pred_region
          %s189 = sand.u32 %s55, 1
          %s190 = scalar_lea.sflag [#allocation7], %s189
          %s191 = sand.u32 %s55, 1
          %s192 = smul.addr %s191, 256
          %s193 = scalar_lea.vmem [#allocation6], %s192
          %s194 = smul.u32 2, %s19
          %s196 = ssub.s32 4096, 4096
          %197 = vsyncadd %s190, %s196
          %s198 = smul.addr %s194, 16
          %s199 = smul.addr %s198, 128
          %s200 = scalar_lea.hbm %s1, %s199
          %s201 = sshll.u32 %s193, 4
          %s202 = int_to_ptr.vmem [resolvable:$true] %s201
          %207 = dma.hbm_to_vmem [thread:$0]  %s200, 4096, %s202, %s190, 128, 128, 8
        $region32: #{tpu_custom_call.1} parent=23 // pred_fallthru
          _
      $region24: #{tpu_custom_call.1} parent=5 // pred_fallthru
        _
      %p208 = scmp.le.s32.totalorder 1, %s19
      %p209 = scmp.lt.s32.totalorder %s19, 5
      %p210 = pnand %p208, %p209
      %p211 = pneg %p210
      // Predicated region
      $region33: #{tpu_custom_call.1} parent=5 // pred_check
        _
      $region34: #{tpu_custom_call.1} parent=5 // pred_check_branch
        %213 = sbr.rel (%p210) target = $region36
      $region35: #{tpu_custom_call.1} parent=5 // pred_region
        %s214 = ssub.s32 %s19, 1
        %s215 = sand.u32 %s32, 1
        %s216 = scalar_lea.sflag [#allocation4], %s215
        %s217 = sand.u32 %s32, 1
        %s218 = smul.addr %s217, 256
        %s219 = scalar_lea.vmem [#allocation3], %s218
        // Predicated region
        $region37: #{tpu_custom_call.1} parent=35 // pred_check
          %p220 = pneg %p45
        $region38: #{tpu_custom_call.1} parent=35 // pred_check_branch
          %222 = sbr.rel (%p220) target = $region40
        $region39: #{tpu_custom_call.1} parent=35 // pred_region
          %223 = dma.done %s216, 4096
        $region40: #{tpu_custom_call.1} parent=35 // pred_fallthru
          _
        %s224 = sand.u32 %s58, 1
        %s225 = scalar_lea.sflag [#allocation7], %s224
        %s226 = sand.u32 %s58, 1
        %s227 = smul.addr %s226, 256
        %s228 = scalar_lea.vmem [#allocation6], %s227
        // Predicated region
        $region41: #{tpu_custom_call.1} parent=35 // pred_check
          %p229 = pneg %p71
        $region42: #{tpu_custom_call.1} parent=35 // pred_check_branch
          %231 = sbr.rel (%p229) target = $region44
        $region43: #{tpu_custom_call.1} parent=35 // pred_region
          %232 = dma.done %s225, 4096
        $region44: #{tpu_custom_call.1} parent=35 // pred_fallthru
          _
        %s233 = sand.u32 %s32, 1
        %s234 = scalar_lea.sflag [#allocation4], %s233
        %s235 = sand.u32 %s32, 1
        %s236 = smul.addr %s235, 256
        %s237 = scalar_lea.vmem [#allocation3], %s236
        %p238 = pneg %p45
        %p239 = pneg %p42
        %s240 = sand.u32 %s58, 1
        %s241 = scalar_lea.sflag [#allocation7], %s240
        %s242 = sand.u32 %s58, 1
        %s243 = smul.addr %s242, 256
        %s244 = scalar_lea.vmem [#allocation6], %s243
        %p245 = pneg %p71
        %p246 = pneg %p68
        %p247 = pneg %p92
        %p248 = pneg %p89
        %p249 = pneg %p113
        %p250 = pneg %p110
        %p251 = pneg %p139
        %p252 = pneg %p136
        %s253 = sand.u32 %s126, 1
        %s254 = scalar_lea.sflag [#allocation5], %s253
        %s255 = sand.u32 %s126, 1
        %s256 = smul.addr %s255, 256
        %s257 = scalar_lea.vmem [#allocation8], %s256
        %s258 = smul.u32 2, %s24
        %s259 = smul.u32 2, %s24
        %s260 = smul.u32 2, %s24
        %v261 = vld [vmem:[%s2] sm:$0xff]
        %v262 = vld [vmem:[%s2 + $0x8] sm:$0xff]
        %v263 = vld [vmem:[%s2 + $0x10] sm:$0xff]
        %v264 = vld [vmem:[%s2 + $0x18] sm:$0xff]
        %v265 = vld [vmem:[%s2 + $0x20] sm:$0xff]
        %v266 = vld [vmem:[%s2 + $0x28] sm:$0xff]
        %v267 = vld [vmem:[%s2 + $0x30] sm:$0xff]
        %v268 = vld [vmem:[%s2 + $0x38] sm:$0xff]
        %v269 = vld [vmem:[%s2 + $0x40] sm:$0xff]
        %v270 = vld [vmem:[%s2 + $0x48] sm:$0xff]
        %v271 = vld [vmem:[%s2 + $0x50] sm:$0xff]
        %v272 = vld [vmem:[%s2 + $0x58] sm:$0xff]
        %v273 = vld [vmem:[%s2 + $0x60] sm:$0xff]
        %v274 = vld [vmem:[%s2 + $0x68] sm:$0xff]
        %v275 = vld [vmem:[%s2 + $0x70] sm:$0xff]
        %v276 = vld [vmem:[%s2 + $0x78] sm:$0xff]
        %v277 = vld [vmem:[%s3] sm:$0xff]
        %v278 = vld [vmem:[%s3 + $0x8] sm:$0xff]
        %v279 = vld [vmem:[%s3 + $0x10] sm:$0xff]
        %v280 = vld [vmem:[%s3 + $0x18] sm:$0xff]
        %v281 = vld [vmem:[%s3 + $0x20] sm:$0xff]
        %v282 = vld [vmem:[%s3 + $0x28] sm:$0xff]
        %v283 = vld [vmem:[%s3 + $0x30] sm:$0xff]
        %v284 = vld [vmem:[%s3 + $0x38] sm:$0xff]
        %v285 = vld [vmem:[%s3 + $0x40] sm:$0xff]
        %v286 = vld [vmem:[%s3 + $0x48] sm:$0xff]
        %v287 = vld [vmem:[%s3 + $0x50] sm:$0xff]
        %v288 = vld [vmem:[%s3 + $0x58] sm:$0xff]
        %v289 = vld [vmem:[%s3 + $0x60] sm:$0xff]
        %v290 = vld [vmem:[%s3 + $0x68] sm:$0xff]
        %v291 = vld [vmem:[%s3 + $0x70] sm:$0xff]
        %v292 = vld [vmem:[%s3 + $0x78] sm:$0xff]
        %v293 = vld [vmem:[%s219] sm:$0xff]
        %v294 = vld [vmem:[%s219 + $0x8] sm:$0xff]
        %v295 = vld [vmem:[%s219 + $0x10] sm:$0xff]
        %v296 = vld [vmem:[%s219 + $0x18] sm:$0xff]
        %v297 = vld [vmem:[%s219 + $0x20] sm:$0xff]
        %v298 = vld [vmem:[%s219 + $0x28] sm:$0xff]
        %v299 = vld [vmem:[%s219 + $0x30] sm:$0xff]
        %v300 = vld [vmem:[%s219 + $0x38] sm:$0xff]
        %v301 = vld [vmem:[%s219 + $0x40] sm:$0xff]
        %v302 = vld [vmem:[%s219 + $0x48] sm:$0xff]
        %v303 = vld [vmem:[%s219 + $0x50] sm:$0xff]
        %v304 = vld [vmem:[%s219 + $0x58] sm:$0xff]
        %v305 = vld [vmem:[%s219 + $0x60] sm:$0xff]
        %v306 = vld [vmem:[%s219 + $0x68] sm:$0xff]
        %v307 = vld [vmem:[%s219 + $0x70] sm:$0xff]
        %v308 = vld [vmem:[%s219 + $0x78] sm:$0xff]
        %s309 = scalar_lea.vmem %s219, 128 [#allocation3]
        %v310 = vld [vmem:[%s309] sm:$0xff]
        %v311 = vld [vmem:[%s309 + $0x8] sm:$0xff]
        %v312 = vld [vmem:[%s309 + $0x10] sm:$0xff]
        %v313 = vld [vmem:[%s309 + $0x18] sm:$0xff]
        %v314 = vld [vmem:[%s309 + $0x20] sm:$0xff]
        %v315 = vld [vmem:[%s309 + $0x28] sm:$0xff]
        %v316 = vld [vmem:[%s309 + $0x30] sm:$0xff]
        %v317 = vld [vmem:[%s309 + $0x38] sm:$0xff]
        %v318 = vld [vmem:[%s309 + $0x40] sm:$0xff]
        %v319 = vld [vmem:[%s309 + $0x48] sm:$0xff]
        %v320 = vld [vmem:[%s309 + $0x50] sm:$0xff]
        %v321 = vld [vmem:[%s309 + $0x58] sm:$0xff]
        %v322 = vld [vmem:[%s309 + $0x60] sm:$0xff]
        %v323 = vld [vmem:[%s309 + $0x68] sm:$0xff]
        %v324 = vld [vmem:[%s309 + $0x70] sm:$0xff]
        %v325 = vld [vmem:[%s309 + $0x78] sm:$0xff]
        %327 = vset.pattern.permute.xlu0 0
        %328 = vperm.xlu0 %327, %v277
        %v329 = vpop.permute.xlu0 %328
        %332 = vset.pattern.permute.xlu0 0
        %333 = vperm.xlu0 %332, %v278
        %v334 = vpop.permute.xlu0 %333
        %337 = vset.pattern.permute.xlu0 0
        %338 = vperm.xlu0 %337, %v279
        %v339 = vpop.permute.xlu0 %338
        %342 = vset.pattern.permute.xlu0 0
        %343 = vperm.xlu0 %342, %v280
        %v344 = vpop.permute.xlu0 %343
        %347 = vset.pattern.permute.xlu0 0
        %348 = vperm.xlu0 %347, %v281
        %v349 = vpop.permute.xlu0 %348
        %352 = vset.pattern.permute.xlu0 0
        %353 = vperm.xlu0 %352, %v282
        %v354 = vpop.permute.xlu0 %353
        %357 = vset.pattern.permute.xlu0 0
        %358 = vperm.xlu0 %357, %v283
        %v359 = vpop.permute.xlu0 %358
        %362 = vset.pattern.permute.xlu0 0
        %363 = vperm.xlu0 %362, %v284
        %v364 = vpop.permute.xlu0 %363
        %367 = vset.pattern.permute.xlu0 0
        %368 = vperm.xlu0 %367, %v285
        %v369 = vpop.permute.xlu0 %368
        %372 = vset.pattern.permute.xlu0 0
        %373 = vperm.xlu0 %372, %v286
        %v374 = vpop.permute.xlu0 %373
        %377 = vset.pattern.permute.xlu0 0
        %378 = vperm.xlu0 %377, %v287
        %v379 = vpop.permute.xlu0 %378
        %382 = vset.pattern.permute.xlu0 0
        %383 = vperm.xlu0 %382, %v288
        %v384 = vpop.permute.xlu0 %383
        %387 = vset.pattern.permute.xlu0 0
        %388 = vperm.xlu0 %387, %v289
        %v389 = vpop.permute.xlu0 %388
        %392 = vset.pattern.permute.xlu0 0
        %393 = vperm.xlu0 %392, %v290
        %v394 = vpop.permute.xlu0 %393
        %397 = vset.pattern.permute.xlu0 0
        %398 = vperm.xlu0 %397, %v291
        %v399 = vpop.permute.xlu0 %398
        %402 = vset.pattern.permute.xlu0 0
        %403 = vperm.xlu0 %402, %v292
        %v404 = vpop.permute.xlu0 %403
        %406 = vmatprep.subr.mxu0 %v310
        %407 = vmatpush1.msra.mxu0 %v293
        %408 = vmatprep.subr.mxu0 %v311
        %409 = vmatpush1.msra.mxu0 %v294
        %410 = vmatprep.subr.mxu0 %v312
        %411 = vmatpush1.msra.mxu0 %v295
        %412 = vmatprep.subr.mxu0 %v313
        %413 = vmatpush1.msra.mxu0 %v296
        %414 = vmatprep.subr.mxu0 %v314
        %415 = vmatpush1.msra.mxu0 %v297
        %416 = vmatprep.subr.mxu0 %v315
        %417 = vmatpush1.msra.mxu0 %v298
        %418 = vmatprep.subr.mxu0 %v316
        %419 = vmatpush1.msra.mxu0 %v299
        %420 = vmatprep.subr.mxu0 %v317
        %421 = vmatpush1.msra.mxu0 %v300
        %422 = vmatprep.subr.mxu0 %v318
        %423 = vmatpush1.msra.mxu0 %v301
        %424 = vmatprep.subr.mxu0 %v319
        %425 = vmatpush1.msra.mxu0 %v302
        %426 = vmatprep.subr.mxu0 %v320
        %427 = vmatpush1.msra.mxu0 %v303
        %428 = vmatprep.subr.mxu0 %v321
        %429 = vmatpush1.msra.mxu0 %v304
        %430 = vmatprep.subr.mxu0 %v322
        %431 = vmatpush1.msra.mxu0 %v305
        %432 = vmatprep.subr.mxu0 %v323
        %433 = vmatpush1.msra.mxu0 %v306
        %434 = vmatprep.subr.mxu0 %v324
        %435 = vmatpush1.msra.mxu0 %v307
        %436 = vmatprep.subr.mxu0 %v325
        %437 = vmatpush1.msra.mxu0 %v308
        %438 = vmatprep.subr.mxu0 0.0
        %439 = vmatpush1.msra.mxu0 0.0
        %440 = vmatprep.subr.mxu0 0.0
        %441 = vmatpush1.msra.mxu0 0.0
        %442 = vmatprep.subr.mxu0 0.0
        %443 = vmatpush1.msra.mxu0 0.0
        %444 = vmatprep.subr.mxu0 0.0
        %445 = vmatpush1.msra.mxu0 0.0
        %446 = vmatprep.subr.mxu0 0.0
        %447 = vmatpush1.msra.mxu0 0.0
        %448 = vmatprep.subr.mxu0 0.0
        %449 = vmatpush1.msra.mxu0 0.0
        %450 = vmatprep.subr.mxu0 0.0
        %451 = vmatpush1.msra.mxu0 0.0
        %452 = vmatprep.subr.mxu0 0.0
        %453 = vmatpush1.msra.mxu0 0.0
        %454 = vmatprep.subr.mxu0 0.0
        %455 = vmatpush1.msra.mxu0 0.0
        %456 = vmatprep.subr.mxu0 0.0
        %457 = vmatpush1.msra.mxu0 0.0
        %458 = vmatprep.subr.mxu0 0.0
        %459 = vmatpush1.msra.mxu0 0.0
        %460 = vmatprep.subr.mxu0 0.0
        %461 = vmatpush1.msra.mxu0 0.0
        %462 = vmatprep.subr.mxu0 0.0
        %463 = vmatpush1.msra.mxu0 0.0
        %464 = vmatprep.subr.mxu0 0.0
        %465 = vmatpush1.msra.mxu0 0.0
        %466 = vmatprep.subr.mxu0 0.0
        %467 = vmatpush1.msra.mxu0 0.0
        %468 = vmatprep.subr.mxu0 0.0
        %469 = vmatpush1.msra.mxu0 0.0
        %470 = vmatprep.mubr.f32.mxu0 0.0
        %471 = vmatmul.mubr.f32.gmra.mrb[0].mxu0 %v261
        %v472 = vpop.f32.mrb[0].mxu0
        %v473 = vadd.f32 %v329, %v472
        %v474 = vpop.f32.mrb[0].mxu0
        %v475 = vadd.f32 %v329, %v474
        %476 = vmatprep.mubr.f32.mxu0 0.0
        %477 = vmatmul.mubr.f32.gmra.mrb[0].mxu0 %v262
        %v478 = vpop.f32.mrb[0].mxu0
        %v479 = vadd.f32 %v334, %v478
        %v480 = vpop.f32.mrb[0].mxu0
        %v481 = vadd.f32 %v334, %v480
        %482 = vmatprep.mubr.f32.mxu0 0.0
        %483 = vmatmul.mubr.f32.gmra.mrb[0].mxu0 %v263
        %v484 = vpop.f32.mrb[0].mxu0
        %v485 = vadd.f32 %v339, %v484
        %v486 = vpop.f32.mrb[0].mxu0
        %v487 = vadd.f32 %v339, %v486
        %488 = vmatprep.mubr.f32.mxu0 0.0
        %489 = vmatmul.mubr.f32.gmra.mrb[0].mxu0 %v264
        %v490 = vpop.f32.mrb[0].mxu0
        %v491 = vadd.f32 %v344, %v490
        %v492 = vpop.f32.mrb[0].mxu0
        %v493 = vadd.f32 %v344, %v492
        %494 = vmatprep.mubr.f32.mxu0 0.0
        %495 = vmatmul.mubr.f32.gmra.mrb[0].mxu0 %v265
        %v496 = vpop.f32.mrb[0].mxu0
        %v497 = vadd.f32 %v349, %v496
        %v498 = vpop.f32.mrb[0].mxu0
        %v499 = vadd.f32 %v349, %v498
        %500 = vmatprep.mubr.f32.mxu0 0.0
        %501 = vmatmul.mubr.f32.gmra.mrb[0].mxu0 %v266
        %v502 = vpop.f32.mrb[0].mxu0
        %v503 = vadd.f32 %v354, %v502
        %v504 = vpop.f32.mrb[0].mxu0
        %v505 = vadd.f32 %v354, %v504
        %506 = vmatprep.mubr.f32.mxu0 0.0
        %507 = vmatmul.mubr.f32.gmra.mrb[0].mxu0 %v267
        %v508 = vpop.f32.mrb[0].mxu0
        %v509 = vadd.f32 %v359, %v508
        %v510 = vpop.f32.mrb[0].mxu0
        %v511 = vadd.f32 %v359, %v510
        %512 = vmatprep.mubr.f32.mxu0 0.0
        %513 = vmatmul.mubr.f32.gmra.mrb[0].mxu0 %v268
        %v514 = vpop.f32.mrb[0].mxu0
        %v515 = vadd.f32 %v364, %v514
        %v516 = vpop.f32.mrb[0].mxu0
        %v517 = vadd.f32 %v364, %v516
        %518 = vmatprep.mubr.f32.mxu0 0.0
        %519 = vmatmul.mubr.f32.gmra.mrb[0].mxu0 %v269
        %v520 = vpop.f32.mrb[0].mxu0
        %v521 = vadd.f32 %v369, %v520
        %v522 = vpop.f32.mrb[0].mxu0
        %v523 = vadd.f32 %v369, %v522
        %524 = vmatprep.mubr.f32.mxu0 0.0
        %525 = vmatmul.mubr.f32.gmra.mrb[0].mxu0 %v270
        %v526 = vpop.f32.mrb[0].mxu0
        %v527 = vadd.f32 %v374, %v526
        %v528 = vpop.f32.mrb[0].mxu0
        %v529 = vadd.f32 %v374, %v528
        %530 = vmatprep.mubr.f32.mxu0 0.0
        %531 = vmatmul.mubr.f32.gmra.mrb[0].mxu0 %v271
        %v532 = vpop.f32.mrb[0].mxu0
        %v533 = vadd.f32 %v379, %v532
        %v534 = vpop.f32.mrb[0].mxu0
        %v535 = vadd.f32 %v379, %v534
        %536 = vmatprep.mubr.f32.mxu0 0.0
        %537 = vmatmul.mubr.f32.gmra.mrb[0].mxu0 %v272
        %v538 = vpop.f32.mrb[0].mxu0
        %v539 = vadd.f32 %v384, %v538
        %v540 = vpop.f32.mrb[0].mxu0
        %v541 = vadd.f32 %v384, %v540
        %542 = vmatprep.mubr.f32.mxu0 0.0
        %543 = vmatmul.mubr.f32.gmra.mrb[0].mxu0 %v273
        %v544 = vpop.f32.mrb[0].mxu0
        %v545 = vadd.f32 %v389, %v544
        %v546 = vpop.f32.mrb[0].mxu0
        %v547 = vadd.f32 %v389, %v546
        %548 = vmatprep.mubr.f32.mxu0 0.0
        %549 = vmatmul.mubr.f32.gmra.mrb[0].mxu0 %v274
        %v550 = vpop.f32.mrb[0].mxu0
        %v551 = vadd.f32 %v394, %v550
        %v552 = vpop.f32.mrb[0].mxu0
        %v553 = vadd.f32 %v394, %v552
        %554 = vmatprep.mubr.f32.mxu0 0.0
        %555 = vmatmul.mubr.f32.gmra.mrb[0].mxu0 %v275
        %v556 = vpop.f32.mrb[0].mxu0
        %v557 = vadd.f32 %v399, %v556
        %v558 = vpop.f32.mrb[0].mxu0
        %v559 = vadd.f32 %v399, %v558
        %560 = vmatprep.mubr.f32.mxu0 0.0
        %561 = vmatmul.mubr.f32.gmra.mrb[0].mxu0 %v276
        %v562 = vpop.f32.mrb[0].mxu0
        %v563 = vadd.f32 %v404, %v562
        %v564 = vpop.f32.mrb[0].mxu0
        %v565 = vadd.f32 %v404, %v564
        %566 = vdwg.mxu0
        %567 = vst [vmem:[#allocation2] sm:$0xff] %v473
        %568 = vst [vmem:[#allocation2 + $0x8] sm:$0xff] %v479
        %569 = vst [vmem:[#allocation2 + $0x10] sm:$0xff] %v485
        %570 = vst [vmem:[#allocation2 + $0x18] sm:$0xff] %v491
        %571 = vst [vmem:[#allocation2 + $0x20] sm:$0xff] %v497
        %572 = vst [vmem:[#allocation2 + $0x28] sm:$0xff] %v503
        %573 = vst [vmem:[#allocation2 + $0x30] sm:$0xff] %v509
        %574 = vst [vmem:[#allocation2 + $0x38] sm:$0xff] %v515
        %575 = vst [vmem:[#allocation2 + $0x40] sm:$0xff] %v521
        %576 = vst [vmem:[#allocation2 + $0x48] sm:$0xff] %v527
        %577 = vst [vmem:[#allocation2 + $0x50] sm:$0xff] %v533
        %578 = vst [vmem:[#allocation2 + $0x58] sm:$0xff] %v539
        %579 = vst [vmem:[#allocation2 + $0x60] sm:$0xff] %v545
        %580 = vst [vmem:[#allocation2 + $0x68] sm:$0xff] %v551
        %581 = vst [vmem:[#allocation2 + $0x70] sm:$0xff] %v557
        %582 = vst [vmem:[#allocation2 + $0x78] sm:$0xff] %v563
        %s583 = scalar_lea.vmem [#allocation2], 128
        %584 = vst [vmem:[%s583] sm:$0xff] %v475
        %585 = vst [vmem:[%s583 + $0x8] sm:$0xff] %v481
        %586 = vst [vmem:[%s583 + $0x10] sm:$0xff] %v487
        %587 = vst [vmem:[%s583 + $0x18] sm:$0xff] %v493
        %588 = vst [vmem:[%s583 + $0x20] sm:$0xff] %v499
        %589 = vst [vmem:[%s583 + $0x28] sm:$0xff] %v505
        %590 = vst [vmem:[%s583 + $0x30] sm:$0xff] %v511
        %591 = vst [vmem:[%s583 + $0x38] sm:$0xff] %v517
        %592 = vst [vmem:[%s583 + $0x40] sm:$0xff] %v523
        %593 = vst [vmem:[%s583 + $0x48] sm:$0xff] %v529
        %594 = vst [vmem:[%s583 + $0x50] sm:$0xff] %v535
        %595 = vst [vmem:[%s583 + $0x58] sm:$0xff] %v541
        %596 = vst [vmem:[%s583 + $0x60] sm:$0xff] %v547
        %597 = vst [vmem:[%s583 + $0x68] sm:$0xff] %v553
        %598 = vst [vmem:[%s583 + $0x70] sm:$0xff] %v559
        %599 = vst [vmem:[%s583 + $0x78] sm:$0xff] %v565
        %v600 = vld [vmem:[%s228] sm:$0xff]
        %v601 = vld [vmem:[%s228 + $0x8] sm:$0xff]
        %v602 = vld [vmem:[%s228 + $0x10] sm:$0xff]
        %v603 = vld [vmem:[%s228 + $0x18] sm:$0xff]
        %v604 = vld [vmem:[%s228 + $0x20] sm:$0xff]
        %v605 = vld [vmem:[%s228 + $0x28] sm:$0xff]
        %v606 = vld [vmem:[%s228 + $0x30] sm:$0xff]
        %v607 = vld [vmem:[%s228 + $0x38] sm:$0xff]
        %v608 = vld [vmem:[%s228 + $0x40] sm:$0xff]
        %v609 = vld [vmem:[%s228 + $0x48] sm:$0xff]
        %v610 = vld [vmem:[%s228 + $0x50] sm:$0xff]
        %v611 = vld [vmem:[%s228 + $0x58] sm:$0xff]
        %v612 = vld [vmem:[%s228 + $0x60] sm:$0xff]
        %v613 = vld [vmem:[%s228 + $0x68] sm:$0xff]
        %v614 = vld [vmem:[%s228 + $0x70] sm:$0xff]
        %v615 = vld [vmem:[%s228 + $0x78] sm:$0xff]
        %616 = vadd.xlane.f32.xlu0 %v600
        %v617 = vpop.xlane.xlu0 %616
        %618 = vadd.xlane.f32.xlu0 %v601
        %v619 = vpop.xlane.xlu0 %618
        %620 = vadd.xlane.f32.xlu0 %v602
        %v621 = vpop.xlane.xlu0 %620
        %622 = vadd.xlane.f32.xlu0 %v603
        %v623 = vpop.xlane.xlu0 %622
        %624 = vadd.xlane.f32.xlu0 %v604
        %v625 = vpop.xlane.xlu0 %624
        %626 = vadd.xlane.f32.xlu0 %v605
        %v627 = vpop.xlane.xlu0 %626
        %628 = vadd.xlane.f32.xlu0 %v606
        %v629 = vpop.xlane.xlu0 %628
        %630 = vadd.xlane.f32.xlu0 %v607
        %v631 = vpop.xlane.xlu0 %630
        %632 = vadd.xlane.f32.xlu0 %v608
        %v633 = vpop.xlane.xlu0 %632
        %634 = vadd.xlane.f32.xlu0 %v609
        %v635 = vpop.xlane.xlu0 %634
        %636 = vadd.xlane.f32.xlu0 %v610
        %v637 = vpop.xlane.xlu0 %636
        %638 = vadd.xlane.f32.xlu0 %v611
        %v639 = vpop.xlane.xlu0 %638
        %640 = vadd.xlane.f32.xlu0 %v612
        %v641 = vpop.xlane.xlu0 %640
        %642 = vadd.xlane.f32.xlu0 %v613
        %v643 = vpop.xlane.xlu0 %642
        %644 = vadd.xlane.f32.xlu0 %v614
        %v645 = vpop.xlane.xlu0 %644
        %646 = vadd.xlane.f32.xlu0 %v615
        %v647 = vpop.xlane.xlu0 %646
        %v648 = vadd.f32 %v617, 0.0001
        %v649 = vadd.f32 %v619, 0.0001
        %v650 = vadd.f32 %v621, 0.0001
        %v651 = vadd.f32 %v623, 0.0001
        %v652 = vadd.f32 %v625, 0.0001
        %v653 = vadd.f32 %v627, 0.0001
        %v654 = vadd.f32 %v629, 0.0001
        %v655 = vadd.f32 %v631, 0.0001
        %v656 = vadd.f32 %v633, 0.0001
        %v657 = vadd.f32 %v635, 0.0001
        %v658 = vadd.f32 %v637, 0.0001
        %v659 = vadd.f32 %v639, 0.0001
        %v660 = vadd.f32 %v641, 0.0001
        %v661 = vadd.f32 %v643, 0.0001
        %v662 = vadd.f32 %v645, 0.0001
        %v663 = vadd.f32 %v647, 0.0001
        %v664 = vrcp.pop %v648
        %v665 = vrcp.pop %v649
        %v666 = vrcp.pop %v650
        %v667 = vrcp.pop %v651
        %v668 = vrcp.pop %v652
        %v669 = vrcp.pop %v653
        %v670 = vrcp.pop %v654
        %v671 = vrcp.pop %v655
        %v672 = vrcp.pop %v656
        %v673 = vrcp.pop %v657
        %v674 = vrcp.pop %v658
        %v675 = vrcp.pop %v659
        %v676 = vrcp.pop %v660
        %v677 = vrcp.pop %v661
        %v678 = vrcp.pop %v662
        %v679 = vrcp.pop %v663
        %v680 = vld [vmem:[#allocation2] sm:$0xff]
        %v681 = vld [vmem:[#allocation2 + $0x8] sm:$0xff]
        %v682 = vld [vmem:[#allocation2 + $0x10] sm:$0xff]
        %v683 = vld [vmem:[#allocation2 + $0x18] sm:$0xff]
        %v684 = vld [vmem:[#allocation2 + $0x20] sm:$0xff]
        %v685 = vld [vmem:[#allocation2 + $0x28] sm:$0xff]
        %v686 = vld [vmem:[#allocation2 + $0x30] sm:$0xff]
        %v687 = vld [vmem:[#allocation2 + $0x38] sm:$0xff]
        %v688 = vld [vmem:[#allocation2 + $0x40] sm:$0xff]
        %v689 = vld [vmem:[#allocation2 + $0x48] sm:$0xff]
        %v690 = vld [vmem:[#allocation2 + $0x50] sm:$0xff]
        %v691 = vld [vmem:[#allocation2 + $0x58] sm:$0xff]
        %v692 = vld [vmem:[#allocation2 + $0x60] sm:$0xff]
        %v693 = vld [vmem:[#allocation2 + $0x68] sm:$0xff]
        %v694 = vld [vmem:[#allocation2 + $0x70] sm:$0xff]
        %v695 = vld [vmem:[#allocation2 + $0x78] sm:$0xff]
        %696 = vmatprep.subr.mxu0 0.0
        %697 = vmatpush1.msra.mxu0 %v680
        %698 = vmatprep.subr.mxu0 0.0
        %699 = vmatpush1.msra.mxu0 %v681
        %700 = vmatprep.subr.mxu0 0.0
        %701 = vmatpush1.msra.mxu0 %v682
        %702 = vmatprep.subr.mxu0 0.0
        %703 = vmatpush1.msra.mxu0 %v683
        %704 = vmatprep.subr.mxu0 0.0
        %705 = vmatpush1.msra.mxu0 %v684
        %706 = vmatprep.subr.mxu0 0.0
        %707 = vmatpush1.msra.mxu0 %v685
        %708 = vmatprep.subr.mxu0 0.0
        %709 = vmatpush1.msra.mxu0 %v686
        %710 = vmatprep.subr.mxu0 0.0
        %711 = vmatpush1.msra.mxu0 %v687
        %712 = vmatprep.subr.mxu0 0.0
        %713 = vmatpush1.msra.mxu0 %v688
        %714 = vmatprep.subr.mxu0 0.0
        %715 = vmatpush1.msra.mxu0 %v689
        %716 = vmatprep.subr.mxu0 0.0
        %717 = vmatpush1.msra.mxu0 %v690
        %718 = vmatprep.subr.mxu0 0.0
        %719 = vmatpush1.msra.mxu0 %v691
        %720 = vmatprep.subr.mxu0 0.0
        %721 = vmatpush1.msra.mxu0 %v692
        %722 = vmatprep.subr.mxu0 0.0
        %723 = vmatpush1.msra.mxu0 %v693
        %724 = vmatprep.subr.mxu0 0.0
        %725 = vmatpush1.msra.mxu0 %v694
        %726 = vmatprep.subr.mxu0 0.0
        %727 = vmatpush1.msra.mxu0 %v695
        %728 = vmatprep.subr.mxu0 0.0
        %729 = vmatpush1.msra.mxu0 0.0
        %730 = vmatprep.subr.mxu0 0.0
        %731 = vmatpush1.msra.mxu0 0.0
        %732 = vmatprep.subr.mxu0 0.0
        %733 = vmatpush1.msra.mxu0 0.0
        %734 = vmatprep.subr.mxu0 0.0
        %735 = vmatpush1.msra.mxu0 0.0
        %736 = vmatprep.subr.mxu0 0.0
        %737 = vmatpush1.msra.mxu0 0.0
        %738 = vmatprep.subr.mxu0 0.0
        %739 = vmatpush1.msra.mxu0 0.0
        %740 = vmatprep.subr.mxu0 0.0
        %741 = vmatpush1.msra.mxu0 0.0
        %742 = vmatprep.subr.mxu0 0.0
        %743 = vmatpush1.msra.mxu0 0.0
        %744 = vmatprep.subr.mxu0 0.0
        %745 = vmatpush1.msra.mxu0 0.0
        %746 = vmatprep.subr.mxu0 0.0
        %747 = vmatpush1.msra.mxu0 0.0
        %748 = vmatprep.subr.mxu0 0.0
        %749 = vmatpush1.msra.mxu0 0.0
        %750 = vmatprep.subr.mxu0 0.0
        %751 = vmatpush1.msra.mxu0 0.0
        %752 = vmatprep.subr.mxu0 0.0
        %753 = vmatpush1.msra.mxu0 0.0
        %754 = vmatprep.subr.mxu0 0.0
        %755 = vmatpush1.msra.mxu0 0.0
        %756 = vmatprep.subr.mxu0 0.0
        %757 = vmatpush1.msra.mxu0 0.0
        %758 = vmatprep.subr.mxu0 0.0
        %759 = vmatpush1.msra.mxu0 0.0
        %760 = vmatprep.mubr.f32.mxu0 0.0
        %761 = vmatmul.mubr.f32.gmra.mrb[0].mxu0 %v600
        %v762 = vpop.f32.mrb[0].mxu0
        %v763 = vadd.f32 0.0, %v762
        %v764 = vpop.f32.mrb[0].mxu0
        %765 = vmatprep.mubr.f32.mxu0 0.0
        %766 = vmatmul.mubr.f32.gmra.mrb[0].mxu0 %v601
        %v767 = vpop.f32.mrb[0].mxu0
        %v768 = vadd.f32 0.0, %v767
        %v769 = vpop.f32.mrb[0].mxu0
        %770 = vmatprep.mubr.f32.mxu0 0.0
        %771 = vmatmul.mubr.f32.gmra.mrb[0].mxu0 %v602
        %v772 = vpop.f32.mrb[0].mxu0
        %v773 = vadd.f32 0.0, %v772
        %v774 = vpop.f32.mrb[0].mxu0
        %775 = vmatprep.mubr.f32.mxu0 0.0
        %776 = vmatmul.mubr.f32.gmra.mrb[0].mxu0 %v603
        %v777 = vpop.f32.mrb[0].mxu0
        %v778 = vadd.f32 0.0, %v777
        %v779 = vpop.f32.mrb[0].mxu0
        %780 = vmatprep.mubr.f32.mxu0 0.0
        %781 = vmatmul.mubr.f32.gmra.mrb[0].mxu0 %v604
        %v782 = vpop.f32.mrb[0].mxu0
        %v783 = vadd.f32 0.0, %v782
        %v784 = vpop.f32.mrb[0].mxu0
        %785 = vmatprep.mubr.f32.mxu0 0.0
        %786 = vmatmul.mubr.f32.gmra.mrb[0].mxu0 %v605
        %v787 = vpop.f32.mrb[0].mxu0
        %v788 = vadd.f32 0.0, %v787
        %v789 = vpop.f32.mrb[0].mxu0
        %790 = vmatprep.mubr.f32.mxu0 0.0
        %791 = vmatmul.mubr.f32.gmra.mrb[0].mxu0 %v606
        %v792 = vpop.f32.mrb[0].mxu0
        %v793 = vadd.f32 0.0, %v792
        %v794 = vpop.f32.mrb[0].mxu0
        %795 = vmatprep.mubr.f32.mxu0 0.0
        %796 = vmatmul.mubr.f32.gmra.mrb[0].mxu0 %v607
        %v797 = vpop.f32.mrb[0].mxu0
        %v798 = vadd.f32 0.0, %v797
        %v799 = vpop.f32.mrb[0].mxu0
        %800 = vmatprep.mubr.f32.mxu0 0.0
        %801 = vmatmul.mubr.f32.gmra.mrb[0].mxu0 %v608
        %v802 = vpop.f32.mrb[0].mxu0
        %v803 = vadd.f32 0.0, %v802
        %v804 = vpop.f32.mrb[0].mxu0
        %805 = vmatprep.mubr.f32.mxu0 0.0
        %806 = vmatmul.mubr.f32.gmra.mrb[0].mxu0 %v609
        %v807 = vpop.f32.mrb[0].mxu0
        %v808 = vadd.f32 0.0, %v807
        %v809 = vpop.f32.mrb[0].mxu0
        %810 = vmatprep.mubr.f32.mxu0 0.0
        %811 = vmatmul.mubr.f32.gmra.mrb[0].mxu0 %v610
        %v812 = vpop.f32.mrb[0].mxu0
        %v813 = vadd.f32 0.0, %v812
        %v814 = vpop.f32.mrb[0].mxu0
        %815 = vmatprep.mubr.f32.mxu0 0.0
        %816 = vmatmul.mubr.f32.gmra.mrb[0].mxu0 %v611
        %v817 = vpop.f32.mrb[0].mxu0
        %v818 = vadd.f32 0.0, %v817
        %v819 = vpop.f32.mrb[0].mxu0
        %820 = vmatprep.mubr.f32.mxu0 0.0
        %821 = vmatmul.mubr.f32.gmra.mrb[0].mxu0 %v612
        %v822 = vpop.f32.mrb[0].mxu0
        %v823 = vadd.f32 0.0, %v822
        %v824 = vpop.f32.mrb[0].mxu0
        %825 = vmatprep.mubr.f32.mxu0 0.0
        %826 = vmatmul.mubr.f32.gmra.mrb[0].mxu0 %v613
        %v827 = vpop.f32.mrb[0].mxu0
        %v828 = vadd.f32 0.0, %v827
        %v829 = vpop.f32.mrb[0].mxu0
        %830 = vmatprep.mubr.f32.mxu0 0.0
        %831 = vmatmul.mubr.f32.gmra.mrb[0].mxu0 %v614
        %v832 = vpop.f32.mrb[0].mxu0
        %v833 = vadd.f32 0.0, %v832
        %v834 = vpop.f32.mrb[0].mxu0
        %835 = vmatprep.mubr.f32.mxu0 0.0
        %836 = vmatmul.mubr.f32.gmra.mrb[0].mxu0 %v615
        %v837 = vpop.f32.mrb[0].mxu0
        %v838 = vadd.f32 0.0, %v837
        %v839 = vpop.f32.mrb[0].mxu0
        %840 = vdwg.mxu0
        %v841 = vmul.f32 %v763, %v664
        %v842 = vmul.f32 %v768, %v665
        %v843 = vmul.f32 %v773, %v666
        %v844 = vmul.f32 %v778, %v667
        %v845 = vmul.f32 %v783, %v668
        %v846 = vmul.f32 %v788, %v669
        %v847 = vmul.f32 %v793, %v670
        %v848 = vmul.f32 %v798, %v671
        %v849 = vmul.f32 %v803, %v672
        %v850 = vmul.f32 %v808, %v673
        %v851 = vmul.f32 %v813, %v674
        %v852 = vmul.f32 %v818, %v675
        %v853 = vmul.f32 %v823, %v676
        %v854 = vmul.f32 %v828, %v677
        %v855 = vmul.f32 %v833, %v678
        %v856 = vmul.f32 %v838, %v679
        %857 = vst [vmem:[%s257] sm:$0xff] %v841
        %858 = vst [vmem:[%s257 + $0x8] sm:$0xff] %v842
        %859 = vst [vmem:[%s257 + $0x10] sm:$0xff] %v843
        %860 = vst [vmem:[%s257 + $0x18] sm:$0xff] %v844
        %861 = vst [vmem:[%s257 + $0x20] sm:$0xff] %v845
        %862 = vst [vmem:[%s257 + $0x28] sm:$0xff] %v846
        %863 = vst [vmem:[%s257 + $0x30] sm:$0xff] %v847
        %864 = vst [vmem:[%s257 + $0x38] sm:$0xff] %v848
        %865 = vst [vmem:[%s257 + $0x40] sm:$0xff] %v849
        %866 = vst [vmem:[%s257 + $0x48] sm:$0xff] %v850
        %867 = vst [vmem:[%s257 + $0x50] sm:$0xff] %v851
        %868 = vst [vmem:[%s257 + $0x58] sm:$0xff] %v852
        %869 = vst [vmem:[%s257 + $0x60] sm:$0xff] %v853
        %870 = vst [vmem:[%s257 + $0x68] sm:$0xff] %v854
        %871 = vst [vmem:[%s257 + $0x70] sm:$0xff] %v855
        %872 = vst [vmem:[%s257 + $0x78] sm:$0xff] %v856
        %s873 = scalar_lea.vmem %s228, 128 [#allocation6]
        %v874 = vld [vmem:[%s873] sm:$0xff]
        %v875 = vld [vmem:[%s873 + $0x8] sm:$0xff]
        %v876 = vld [vmem:[%s873 + $0x10] sm:$0xff]
        %v877 = vld [vmem:[%s873 + $0x18] sm:$0xff]
        %v878 = vld [vmem:[%s873 + $0x20] sm:$0xff]
        %v879 = vld [vmem:[%s873 + $0x28] sm:$0xff]
        %v880 = vld [vmem:[%s873 + $0x30] sm:$0xff]
        %v881 = vld [vmem:[%s873 + $0x38] sm:$0xff]
        %v882 = vld [vmem:[%s873 + $0x40] sm:$0xff]
        %v883 = vld [vmem:[%s873 + $0x48] sm:$0xff]
        %v884 = vld [vmem:[%s873 + $0x50] sm:$0xff]
        %v885 = vld [vmem:[%s873 + $0x58] sm:$0xff]
        %v886 = vld [vmem:[%s873 + $0x60] sm:$0xff]
        %v887 = vld [vmem:[%s873 + $0x68] sm:$0xff]
        %v888 = vld [vmem:[%s873 + $0x70] sm:$0xff]
        %v889 = vld [vmem:[%s873 + $0x78] sm:$0xff]
        %890 = vadd.xlane.f32.xlu0 %v874
        %v891 = vpop.xlane.xlu0 %890
        %892 = vadd.xlane.f32.xlu0 %v875
        %v893 = vpop.xlane.xlu0 %892
        %894 = vadd.xlane.f32.xlu0 %v876
        %v895 = vpop.xlane.xlu0 %894
        %896 = vadd.xlane.f32.xlu0 %v877
        %v897 = vpop.xlane.xlu0 %896
        %898 = vadd.xlane.f32.xlu0 %v878
        %v899 = vpop.xlane.xlu0 %898
        %900 = vadd.xlane.f32.xlu0 %v879
        %v901 = vpop.xlane.xlu0 %900
        %902 = vadd.xlane.f32.xlu0 %v880
        %v903 = vpop.xlane.xlu0 %902
        %904 = vadd.xlane.f32.xlu0 %v881
        %v905 = vpop.xlane.xlu0 %904
        %906 = vadd.xlane.f32.xlu0 %v882
        %v907 = vpop.xlane.xlu0 %906
        %908 = vadd.xlane.f32.xlu0 %v883
        %v909 = vpop.xlane.xlu0 %908
        %910 = vadd.xlane.f32.xlu0 %v884
        %v911 = vpop.xlane.xlu0 %910
        %912 = vadd.xlane.f32.xlu0 %v885
        %v913 = vpop.xlane.xlu0 %912
        %914 = vadd.xlane.f32.xlu0 %v886
        %v915 = vpop.xlane.xlu0 %914
        %916 = vadd.xlane.f32.xlu0 %v887
        %v917 = vpop.xlane.xlu0 %916
        %918 = vadd.xlane.f32.xlu0 %v888
        %v919 = vpop.xlane.xlu0 %918
        %920 = vadd.xlane.f32.xlu0 %v889
        %v921 = vpop.xlane.xlu0 %920
        %v922 = vadd.f32 %v891, 0.0001
        %v923 = vadd.f32 %v893, 0.0001
        %v924 = vadd.f32 %v895, 0.0001
        %v925 = vadd.f32 %v897, 0.0001
        %v926 = vadd.f32 %v899, 0.0001
        %v927 = vadd.f32 %v901, 0.0001
        %v928 = vadd.f32 %v903, 0.0001
        %v929 = vadd.f32 %v905, 0.0001
        %v930 = vadd.f32 %v907, 0.0001
        %v931 = vadd.f32 %v909, 0.0001
        %v932 = vadd.f32 %v911, 0.0001
        %v933 = vadd.f32 %v913, 0.0001
        %v934 = vadd.f32 %v915, 0.0001
        %v935 = vadd.f32 %v917, 0.0001
        %v936 = vadd.f32 %v919, 0.0001
        %v937 = vadd.f32 %v921, 0.0001
        %v938 = vrcp.pop %v922
        %v939 = vrcp.pop %v923
        %v940 = vrcp.pop %v924
        %v941 = vrcp.pop %v925
        %v942 = vrcp.pop %v926
        %v943 = vrcp.pop %v927
        %v944 = vrcp.pop %v928
        %v945 = vrcp.pop %v929
        %v946 = vrcp.pop %v930
        %v947 = vrcp.pop %v931
        %v948 = vrcp.pop %v932
        %v949 = vrcp.pop %v933
        %v950 = vrcp.pop %v934
        %v951 = vrcp.pop %v935
        %v952 = vrcp.pop %v936
        %v953 = vrcp.pop %v937
        %v954 = vld [vmem:[%s583] sm:$0xff]
        %v955 = vld [vmem:[%s583 + $0x8] sm:$0xff]
        %v956 = vld [vmem:[%s583 + $0x10] sm:$0xff]
        %v957 = vld [vmem:[%s583 + $0x18] sm:$0xff]
        %v958 = vld [vmem:[%s583 + $0x20] sm:$0xff]
        %v959 = vld [vmem:[%s583 + $0x28] sm:$0xff]
        %v960 = vld [vmem:[%s583 + $0x30] sm:$0xff]
        %v961 = vld [vmem:[%s583 + $0x38] sm:$0xff]
        %v962 = vld [vmem:[%s583 + $0x40] sm:$0xff]
        %v963 = vld [vmem:[%s583 + $0x48] sm:$0xff]
        %v964 = vld [vmem:[%s583 + $0x50] sm:$0xff]
        %v965 = vld [vmem:[%s583 + $0x58] sm:$0xff]
        %v966 = vld [vmem:[%s583 + $0x60] sm:$0xff]
        %v967 = vld [vmem:[%s583 + $0x68] sm:$0xff]
        %v968 = vld [vmem:[%s583 + $0x70] sm:$0xff]
        %v969 = vld [vmem:[%s583 + $0x78] sm:$0xff]
        %970 = vmatprep.subr.mxu0 0.0
        %971 = vmatpush1.msra.mxu0 %v954
        %972 = vmatprep.subr.mxu0 0.0
        %973 = vmatpush1.msra.mxu0 %v955
        %974 = vmatprep.subr.mxu0 0.0
        %975 = vmatpush1.msra.mxu0 %v956
        %976 = vmatprep.subr.mxu0 0.0
        %977 = vmatpush1.msra.mxu0 %v957
        %978 = vmatprep.subr.mxu0 0.0
        %979 = vmatpush1.msra.mxu0 %v958
        %980 = vmatprep.subr.mxu0 0.0
        %981 = vmatpush1.msra.mxu0 %v959
        %982 = vmatprep.subr.mxu0 0.0
        %983 = vmatpush1.msra.mxu0 %v960
        %984 = vmatprep.subr.mxu0 0.0
        %985 = vmatpush1.msra.mxu0 %v961
        %986 = vmatprep.subr.mxu0 0.0
        %987 = vmatpush1.msra.mxu0 %v962
        %988 = vmatprep.subr.mxu0 0.0
        %989 = vmatpush1.msra.mxu0 %v963
        %990 = vmatprep.subr.mxu0 0.0
        %991 = vmatpush1.msra.mxu0 %v964
        %992 = vmatprep.subr.mxu0 0.0
        %993 = vmatpush1.msra.mxu0 %v965
        %994 = vmatprep.subr.mxu0 0.0
        %995 = vmatpush1.msra.mxu0 %v966
        %996 = vmatprep.subr.mxu0 0.0
        %997 = vmatpush1.msra.mxu0 %v967
        %998 = vmatprep.subr.mxu0 0.0
        %999 = vmatpush1.msra.mxu0 %v968
        %1000 = vmatprep.subr.mxu0 0.0
        %1001 = vmatpush1.msra.mxu0 %v969
        %1002 = vmatprep.subr.mxu0 0.0
        %1003 = vmatpush1.msra.mxu0 0.0
        %1004 = vmatprep.subr.mxu0 0.0
        %1005 = vmatpush1.msra.mxu0 0.0
        %1006 = vmatprep.subr.mxu0 0.0
        %1007 = vmatpush1.msra.mxu0 0.0
        %1008 = vmatprep.subr.mxu0 0.0
        %1009 = vmatpush1.msra.mxu0 0.0
        %1010 = vmatprep.subr.mxu0 0.0
        %1011 = vmatpush1.msra.mxu0 0.0
        %1012 = vmatprep.subr.mxu0 0.0
        %1013 = vmatpush1.msra.mxu0 0.0
        %1014 = vmatprep.subr.mxu0 0.0
        %1015 = vmatpush1.msra.mxu0 0.0
        %1016 = vmatprep.subr.mxu0 0.0
        %1017 = vmatpush1.msra.mxu0 0.0
        %1018 = vmatprep.subr.mxu0 0.0
        %1019 = vmatpush1.msra.mxu0 0.0
        %1020 = vmatprep.subr.mxu0 0.0
        %1021 = vmatpush1.msra.mxu0 0.0
        %1022 = vmatprep.subr.mxu0 0.0
        %1023 = vmatpush1.msra.mxu0 0.0
        %1024 = vmatprep.subr.mxu0 0.0
        %1025 = vmatpush1.msra.mxu0 0.0
        %1026 = vmatprep.subr.mxu0 0.0
        %1027 = vmatpush1.msra.mxu0 0.0
        %1028 = vmatprep.subr.mxu0 0.0
        %1029 = vmatpush1.msra.mxu0 0.0
        %1030 = vmatprep.subr.mxu0 0.0
        %1031 = vmatpush1.msra.mxu0 0.0
        %1032 = vmatprep.subr.mxu0 0.0
        %1033 = vmatpush1.msra.mxu0 0.0
        %1034 = vmatprep.mubr.f32.mxu0 0.0
        %1035 = vmatmul.mubr.f32.gmra.mrb[0].mxu0 %v874
        %v1036 = vpop.f32.mrb[0].mxu0
        %v1037 = vadd.f32 0.0, %v1036
        %v1038 = vpop.f32.mrb[0].mxu0
        %1039 = vmatprep.mubr.f32.mxu0 0.0
        %1040 = vmatmul.mubr.f32.gmra.mrb[0].mxu0 %v875
        %v1041 = vpop.f32.mrb[0].mxu0
        %v1042 = vadd.f32 0.0, %v1041
        %v1043 = vpop.f32.mrb[0].mxu0
        %1044 = vmatprep.mubr.f32.mxu0 0.0
        %1045 = vmatmul.mubr.f32.gmra.mrb[0].mxu0 %v876
        %v1046 = vpop.f32.mrb[0].mxu0
        %v1047 = vadd.f32 0.0, %v1046
        %v1048 = vpop.f32.mrb[0].mxu0
        %1049 = vmatprep.mubr.f32.mxu0 0.0
        %1050 = vmatmul.mubr.f32.gmra.mrb[0].mxu0 %v877
        %v1051 = vpop.f32.mrb[0].mxu0
        %v1052 = vadd.f32 0.0, %v1051
        %v1053 = vpop.f32.mrb[0].mxu0
        %1054 = vmatprep.mubr.f32.mxu0 0.0
        %1055 = vmatmul.mubr.f32.gmra.mrb[0].mxu0 %v878
        %v1056 = vpop.f32.mrb[0].mxu0
        %v1057 = vadd.f32 0.0, %v1056
        %v1058 = vpop.f32.mrb[0].mxu0
        %1059 = vmatprep.mubr.f32.mxu0 0.0
        %1060 = vmatmul.mubr.f32.gmra.mrb[0].mxu0 %v879
        %v1061 = vpop.f32.mrb[0].mxu0
        %v1062 = vadd.f32 0.0, %v1061
        %v1063 = vpop.f32.mrb[0].mxu0
        %1064 = vmatprep.mubr.f32.mxu0 0.0
        %1065 = vmatmul.mubr.f32.gmra.mrb[0].mxu0 %v880
        %v1066 = vpop.f32.mrb[0].mxu0
        %v1067 = vadd.f32 0.0, %v1066
        %v1068 = vpop.f32.mrb[0].mxu0
        %1069 = vmatprep.mubr.f32.mxu0 0.0
        %1070 = vmatmul.mubr.f32.gmra.mrb[0].mxu0 %v881
        %v1071 = vpop.f32.mrb[0].mxu0
        %v1072 = vadd.f32 0.0, %v1071
        %v1073 = vpop.f32.mrb[0].mxu0
        %1074 = vmatprep.mubr.f32.mxu0 0.0
        %1075 = vmatmul.mubr.f32.gmra.mrb[0].mxu0 %v882
        %v1076 = vpop.f32.mrb[0].mxu0
        %v1077 = vadd.f32 0.0, %v1076
        %v1078 = vpop.f32.mrb[0].mxu0
        %1079 = vmatprep.mubr.f32.mxu0 0.0
        %1080 = vmatmul.mubr.f32.gmra.mrb[0].mxu0 %v883
        %v1081 = vpop.f32.mrb[0].mxu0
        %v1082 = vadd.f32 0.0, %v1081
        %v1083 = vpop.f32.mrb[0].mxu0
        %1084 = vmatprep.mubr.f32.mxu0 0.0
        %1085 = vmatmul.mubr.f32.gmra.mrb[0].mxu0 %v884
        %v1086 = vpop.f32.mrb[0].mxu0
        %v1087 = vadd.f32 0.0, %v1086
        %v1088 = vpop.f32.mrb[0].mxu0
        %1089 = vmatprep.mubr.f32.mxu0 0.0
        %1090 = vmatmul.mubr.f32.gmra.mrb[0].mxu0 %v885
        %v1091 = vpop.f32.mrb[0].mxu0
        %v1092 = vadd.f32 0.0, %v1091
        %v1093 = vpop.f32.mrb[0].mxu0
        %1094 = vmatprep.mubr.f32.mxu0 0.0
        %1095 = vmatmul.mubr.f32.gmra.mrb[0].mxu0 %v886
        %v1096 = vpop.f32.mrb[0].mxu0
        %v1097 = vadd.f32 0.0, %v1096
        %v1098 = vpop.f32.mrb[0].mxu0
        %1099 = vmatprep.mubr.f32.mxu0 0.0
        %1100 = vmatmul.mubr.f32.gmra.mrb[0].mxu0 %v887
        %v1101 = vpop.f32.mrb[0].mxu0
        %v1102 = vadd.f32 0.0, %v1101
        %v1103 = vpop.f32.mrb[0].mxu0
        %1104 = vmatprep.mubr.f32.mxu0 0.0
        %1105 = vmatmul.mubr.f32.gmra.mrb[0].mxu0 %v888
        %v1106 = vpop.f32.mrb[0].mxu0
        %v1107 = vadd.f32 0.0, %v1106
        %v1108 = vpop.f32.mrb[0].mxu0
        %1109 = vmatprep.mubr.f32.mxu0 0.0
        %1110 = vmatmul.mubr.f32.gmra.mrb[0].mxu0 %v889
        %v1111 = vpop.f32.mrb[0].mxu0
        %v1112 = vadd.f32 0.0, %v1111
        %v1113 = vpop.f32.mrb[0].mxu0
        %1114 = vdwg.mxu0
        %v1115 = vmul.f32 %v1037, %v938
        %v1116 = vmul.f32 %v1042, %v939
        %v1117 = vmul.f32 %v1047, %v940
        %v1118 = vmul.f32 %v1052, %v941
        %v1119 = vmul.f32 %v1057, %v942
        %v1120 = vmul.f32 %v1062, %v943
        %v1121 = vmul.f32 %v1067, %v944
        %v1122 = vmul.f32 %v1072, %v945
        %v1123 = vmul.f32 %v1077, %v946
        %v1124 = vmul.f32 %v1082, %v947
        %v1125 = vmul.f32 %v1087, %v948
        %v1126 = vmul.f32 %v1092, %v949
        %v1127 = vmul.f32 %v1097, %v950
        %v1128 = vmul.f32 %v1102, %v951
        %v1129 = vmul.f32 %v1107, %v952
        %v1130 = vmul.f32 %v1112, %v953
        %s1131 = scalar_lea.vmem %s257, 128 [#allocation8]
        %1132 = vst [vmem:[%s1131] sm:$0xff] %v1115
        %1133 = vst [vmem:[%s1131 + $0x8] sm:$0xff] %v1116
        %1134 = vst [vmem:[%s1131 + $0x10] sm:$0xff] %v1117
        %1135 = vst [vmem:[%s1131 + $0x18] sm:$0xff] %v1118
        %1136 = vst [vmem:[%s1131 + $0x20] sm:$0xff] %v1119
        %1137 = vst [vmem:[%s1131 + $0x28] sm:$0xff] %v1120
        %1138 = vst [vmem:[%s1131 + $0x30] sm:$0xff] %v1121
        %1139 = vst [vmem:[%s1131 + $0x38] sm:$0xff] %v1122
        %1140 = vst [vmem:[%s1131 + $0x40] sm:$0xff] %v1123
        %1141 = vst [vmem:[%s1131 + $0x48] sm:$0xff] %v1124
        %1142 = vst [vmem:[%s1131 + $0x50] sm:$0xff] %v1125
        %1143 = vst [vmem:[%s1131 + $0x58] sm:$0xff] %v1126
        %1144 = vst [vmem:[%s1131 + $0x60] sm:$0xff] %v1127
        %1145 = vst [vmem:[%s1131 + $0x68] sm:$0xff] %v1128
        %1146 = vst [vmem:[%s1131 + $0x70] sm:$0xff] %v1129
        %1147 = vst [vmem:[%s1131 + $0x78] sm:$0xff] %v1130
        %s1148 = sand.u32 %s126, 1
        %s1149 = scalar_lea.sflag [#allocation5], %s1148
        %s1150 = sand.u32 %s126, 1
        %s1151 = smul.addr %s1150, 256
        %s1152 = scalar_lea.vmem [#allocation8], %s1151
        // Predicated region
        $region45: #{tpu_custom_call.1} parent=35 // pred_check
          %p1153 = pneg %p136
        $region46: #{tpu_custom_call.1} parent=35 // pred_check_branch
          %1155 = sbr.rel (%p1153) target = $region48
        $region47: #{tpu_custom_call.1} parent=35 // pred_region
          %s1156 = smul.u32 2, %s24
          %s1158 = ssub.s32 4096, 4096
          %1159 = vsyncadd %s1149, %s1158
          %s1160 = smul.addr %s1156, 16
          %s1161 = smul.addr %s1160, 128
          %s1162 = scalar_lea.hbm %s4, %s1161
          %s1163 = sshll.u32 %s1152, 4
          %s1164 = int_to_ptr.vmem [resolvable:$true] %s1163
          %1169 = dma.vmem_to_hbm [thread:$0]  %s1164, 4096, %s1162, %s1149, 128, 128, 8
        $region48: #{tpu_custom_call.1} parent=35 // pred_fallthru
          _
      $region36: #{tpu_custom_call.1} parent=5 // pred_fallthru
        _
      %p1170 = scmp.le.s32.totalorder 2, %s19
      // Predicated region
      $region49: #{tpu_custom_call.1} parent=5 // pred_check
        %p1171 = pneg %p1170
      $region50: #{tpu_custom_call.1} parent=5 // pred_check_branch
        %1173 = sbr.rel (%p1171) target = $region52
      $region51: #{tpu_custom_call.1} parent=5 // pred_region
        %s1174 = ssub.s32 %s19, 2
        // Predicated region
        $region53: #{tpu_custom_call.1} parent=51 // pred_check
          %p1175 = pneg %p142
        $region54: #{tpu_custom_call.1} parent=51 // pred_check_branch
          %1177 = sbr.rel (%p1175) target = $region56
        $region55: #{tpu_custom_call.1} parent=51 // pred_region
          %s1178 = sand.u32 %s127, 1
          %s1179 = scalar_lea.sflag [#allocation5], %s1178
          %s1180 = sand.u32 %s127, 1
          %s1181 = smul.addr %s1180, 256
          %s1182 = scalar_lea.vmem [#allocation8], %s1181
          %1183 = dma.done %s1179, 4096
        $region56: #{tpu_custom_call.1} parent=51 // pred_fallthru
          _
      $region52: #{tpu_custom_call.1} parent=5 // pred_fallthru
        _
    $region6: #{tpu_custom_call.1} parent=1 // loop_footer
      %s23 = sadd.s32 1, %s19
    $region7: #{tpu_custom_call.1} parent=1 // loop_footer_branch
      %18 = sbr.rel target = $region3
    $region8: #{tpu_custom_call.1} parent=1 // loop_exit
      _
    %1184 = vsyncpa [#allocation4], 1
    %s1185 = scalar_lea.sflag [#allocation4], 1
    %1186 = vsyncpa %s1185, 1
    %1187 = vsyncpa [#allocation7], 1
    %s1188 = scalar_lea.sflag [#allocation7], 1
    %1189 = vsyncpa %s1188, 1
    %1190 = vsyncpa [#allocation5], 1
    %s1191 = scalar_lea.sflag [#allocation5], 1
    %1192 = vsyncpa %s1191, 1

</llo_original>
